<compile_context>
chip_gen: v5e
topology: v5e:2x2
jax: 0.10.0
libtpu: 0.0.40
codegen_flags: <defaults>
</compile_context>

<pallas_src>
import jax
import jax.numpy as jnp
from jax import lax
from jax.experimental import pallas as pl
from jax.experimental.pallas import tpu as pltpu

BN_EPS = 1e-5
_LANE = 128
_SUBLANE_BF16 = 16   # bf16 vreg packing is (16, 128); keep H tiles multiples of 16


def _round_up(n, m):
    return ((n + m - 1) // m) * m


def _maybe_pad(a, target_shape):
    pads = tuple((0, t - s) for s, t in zip(a.shape, target_shape))
    if any(hi for _, hi in pads):
        return jnp.pad(a, pads)
    return a


def _make_kernel(reassoc):
    def kernel(x_ref, t_ref, wg_ref, bg_ref, ww_ref, bw_ref, out_ref):
        bt, hp, cp = x_ref.shape
        ip = wg_ref.shape[1]

        x = x_ref[...]                                      # native dtype (bf16 or f32)
        xf = x.astype(jnp.float32)                          # residual in f32
        x_b = x.reshape(bt * hp, cp).astype(jnp.bfloat16)   # MXU operand

        # g: position-wise 1x1 conv (1/N pre-folded into wg/bg). bf16 MXU, f32 accumulate.
        g2d = jnp.dot(x_b, wg_ref[...], preferred_element_type=jnp.float32) + bg_ref[...]
        g = g2d.reshape(bt, hp, ip)

        # l2-normalize txtD rows in f32, matching torch l2norm: x / (sqrt(sum x^2) + 1e-8).
        t = t_ref[...].astype(jnp.float32)
        inv = 1.0 / (jnp.sqrt(jnp.sum(t * t, axis=-1, keepdims=True)) + 1e-8)
        tn = t * inv

        tn_b = tn.astype(jnp.bfloat16)
        g_b = g.astype(jnp.bfloat16)

        if reassoc:
            # y = tn @ (tn^T @ g): avoids materializing the (H, H) affinity when H is large.
            s = jnp.einsum("bhd,bhi->bdi", tn_b, g_b,
                           preferred_element_type=jnp.float32)
            y = jnp.einsum("bhd,bdi->bhi", tn_b, s.astype(jnp.bfloat16),
                           preferred_element_type=jnp.float32)
        else:
            # R path: first contraction is over the lane-dense D axis -> good MXU fill for small H.
            r = jnp.einsum("bqd,bkd->bqk", tn_b, tn_b,
                           preferred_element_type=jnp.float32)
            y = jnp.einsum("bqk,bki->bqi", r.astype(jnp.bfloat16), g_b,
                           preferred_element_type=jnp.float32)

        # W conv with eval-mode BatchNorm folded in, then residual (f32 epilogue).
        y2d = y.reshape(bt * hp, ip).astype(jnp.bfloat16)
        wy2d = jnp.dot(y2d, ww_ref[...],
                       preferred_element_type=jnp.float32) + bw_ref[...]
        out_ref[...] = (wy2d.reshape(bt, hp, cp) + xf).astype(out_ref.dtype)

    return kernel


def rs_gcns_forward(v, txtD, params, imgD=None, *, max_batch_tile=None, alias_input=True):
    """v: (B0, B1, H, C), txtD: (B0, B1, H, Dt) -> (B0, B1, H, C) in v.dtype.
    imgD is accepted for signature parity with the PyTorch forward but unused there too."""
    del imgD
    B0, B1, H, C = v.shape
    Dt = txtD.shape[-1]
    I = params["wg"].shape[0]
    BB = B0 * B1

    # ---- fold eval-mode BN into the W conv; fold the 1/N (= 1/H) scale into the g conv ----
    # TODO(synk): training-mode BatchNorm (batch statistics) is not implemented; eval-mode only.
    scale = params["gamma"] * lax.rsqrt(params["var"] + BN_EPS)            # (C,)
    wwT_eff = (params["ww"] * scale[:, None]).T                            # (I, C)
    bw_eff = (params["bw"] - params["mean"]) * scale + params["beta"]      # (C,)
    wgT_scaled = params["wg"].T * (1.0 / H)                                # (C, I)
    bg_scaled = params["bg"] * (1.0 / H)                                   # (I,)

    # ---- lane/sublane-dense shapes (padding is exact and only applied when needed) ----
    Cp = _round_up(C, _LANE)
    Ip = _round_up(I, _LANE)
    Dp = _round_up(Dt, _LANE)
    Hp = _round_up(H, _SUBLANE_BF16)

    # ---- attention association, MXU-aware: a contraction over H (tiny) runs a 256-wide MXU
    # nearly empty, so cost it with an effective K of max(Hp, 256). Both forms are exact. ----
    k_eff = max(Hp, 256)
    cost_reassoc = Dp * Ip * k_eff + Hp * Ip * Dp     # tn^T@g (K=H) then tn@S (K=D)
    cost_rpath = Hp * Hp * Dp + Hp * Ip * k_eff       # tn@tn^T (K=D) then R@g (K=H)
    reassoc = cost_reassoc < cost_rpath

    # ---- generation-aware VMEM budget ----
    try:
        vmem_cap = int(pltpu.get_tpu_info().vmem_capacity_bytes)
    except Exception:
        vmem_cap = 64 * 1024 * 1024                   # conservative (v7x-sized) fallback
    vmem_limit = (vmem_cap * 7) // 8                  # ~56 MiB on v7x, ~112 MiB on v5e/v6e

    f32 = 4
    isz_v = jnp.dtype(v.dtype).itemsize
    isz_t = jnp.dtype(txtD.dtype).itemsize
    # Grid-invariant weights/biases still get default double-buffering (account x2).
    # NOTE: pl.Buffered(1) on those specs would halve this, left at default for portability.
    weights_bytes = 2 * (2 * Cp * Ip * 2 + (Ip + Cp) * f32)
    # Per batch-element VMEM: double-buffered I/O blocks (native dtype) + f32/bf16 intermediates.
    blk_io = Hp * Cp * isz_v * 2 + Hp * Dp * isz_t
    per_elem = (2 * blk_io
                + f32 * (Hp * Cp + Hp * Dp + 2 * Hp * Ip)      # xf, tn, g, y (f32)
                + 2 * (Hp * Dp + Hp * Ip + Hp * Cp)            # bf16 operand copies
                + f32 * (Dp * Ip if reassoc else Hp * Hp))     # S or R

    tile_budget = max(per_elem, vmem_limit - weights_bytes - 8 * 1024 * 1024)
    bt_vmem = max(1, tile_budget // per_elem)
    bt_mxu = pl.cdiv(1024, Hp)            # target M = Bt*Hp ~ 1024 rows for the 1x1-conv matmuls
    Bt = min(bt_vmem, bt_mxu)
    if max_batch_tile is not None:
        Bt = min(Bt, max_batch_tile)
    if BB >= 2:
        Bt = min(Bt, pl.cdiv(BB, 2))      # >= 2 grid steps so v7x's second TensorCore gets work
    Bt = max(1, int(Bt))

    BBp = _round_up(BB, Bt)               # pad the batch instead of collapsing to Bt=1
    grid = BBp // Bt

    # ---- stage operands (no dtype change for v/txtD; pads only where required) ----
    x = _maybe_pad(v.reshape(BB, H, C), (BBp, Hp, Cp))
    t = _maybe_pad(txtD.reshape(BB, H, Dt), (BBp, Hp, Dp))
    wg = _maybe_pad(wgT_scaled, (Cp, Ip)).astype(jnp.bfloat16)
    ww = _maybe_pad(wwT_eff, (Ip, Cp)).astype(jnp.bfloat16)
    bg = _maybe_pad(bg_scaled.reshape(1, I), (1, Ip)).astype(jnp.float32)
    bw = _maybe_pad(bw_eff.reshape(1, C), (1, Cp)).astype(jnp.float32)

    def full_spec(shape):
        ndim = len(shape)
        return pl.BlockSpec(shape, lambda b, _n=ndim: (0,) * _n)

    grid_spec = pltpu.PrefetchScalarGridSpec(
        num_scalar_prefetch=0,
        grid=(grid,),
        in_specs=[
            pl.BlockSpec((Bt, Hp, Cp), lambda b: (b, 0, 0)),   # x (residual + g-conv input)
            pl.BlockSpec((Bt, Hp, Dp), lambda b: (b, 0, 0)),   # txtD
            full_spec((Cp, Ip)), full_spec((1, Ip)),           # g conv (1/N folded)
            full_spec((Ip, Cp)), full_spec((1, Cp)),           # W conv (BN folded)
        ],
        out_specs=pl.BlockSpec((Bt, Hp, Cp), lambda b: (b, 0, 0)),
    )

    call_kwargs = {}
    if alias_input:
        # x and out have identical shape/dtype and each x block is fully consumed before its out
        # block is written, so aliasing is safe; under a whole-model jit this removes one
        # full-size HBM buffer (XLA inserts a defensive copy otherwise).
        call_kwargs["input_output_aliases"] = {0: 0}

    out = pl.pallas_call(
        _make_kernel(reassoc),
        out_shape=jax.ShapeDtypeStruct((BBp, Hp, Cp), v.dtype),
        grid_spec=grid_spec,
        compiler_params=pltpu.CompilerParams(
            dimension_semantics=("parallel",),
            vmem_limit_bytes=int(vmem_limit)),
        **call_kwargs,
    )(x, t, wg, bg, ww, bw)

    # Slice off padding only where it was actually added.
    if BBp != BB:
        out = out[:BB]
    if Hp != H:
        out = out[:, :H, :]
    if Cp != C:
        out = out[:, :, :C]
    return out.reshape(B0, B1, H, C)


# ----------------------------- pure-JAX reference (f32) ------------------------------------
def _l2norm_ref(x, eps=1e-8):
    norm = jnp.sqrt(jnp.sum(x * x, axis=-1, keepdims=True)) + eps
    return x / norm


def rs_gcns_reference(v, txtD, p):
    """Mirrors the PyTorch Rs_GCNS.forward (eval-mode BatchNorm)."""
    vp = jnp.transpose(v, (0, 3, 2, 1))                        # (B0, C, H, B1)

    def conv1x1(w, b, x):                                      # w: (O, Cin), x: (B0, Cin, H, W)
        return jnp.einsum("oc,bchw->bohw", w, x) + b[None, :, None, None]

    g_v = jnp.transpose(conv1x1(p["wg"], p["bg"], vp), (0, 3, 2, 1))   # (B0, B1, H, I)
    tn = _l2norm_ref(txtD)                                     # (B0, B1, H, Dt)
    R = jnp.matmul(tn, jnp.swapaxes(tn, -1, -2))               # (B0, B1, H, H)
    R = R / R.shape[-1]
    y = jnp.matmul(R, g_v)                                     # (B0, B1, H, I)
    y = jnp.transpose(y, (0, 3, 2, 1))                         # (B0, I, H, B1)
    wy = conv1x1(p["ww"], p["bw"], y)                          # (B0, C, H, B1)
    inv_std = 1.0 / jnp.sqrt(p["var"] + BN_EPS)
    bn = ((wy - p["mean"][None, :, None, None]) * inv_std[None, :, None, None]
          * p["gamma"][None, :, None, None] + p["beta"][None, :, None, None])
    v_star = bn + vp
    return jnp.transpose(v_star, (0, 3, 2, 1))                 # (B0, B1, H, C)


def make_params(key, in_channels, inter_channels):
    """Deterministic Conv2d-style init.  NOTE: the PyTorch module zero-inits the BatchNorm
    weight/bias (identity block at init); gamma/beta/mean/var are drawn nonzero here so the
    kernel path (and the BN fold) is actually exercised."""
    C, I = in_channels, inter_channels
    ks = jax.random.split(key, 8)

    def unif(k, shape, fan_in):
        bound = 1.0 / (fan_in ** 0.5)
        return jax.random.uniform(k, shape, jnp.float32, -bound, bound)

    return dict(
        wg=unif(ks[0], (I, C), C), bg=unif(ks[1], (I,), C),
        ww=unif(ks[2], (C, I), I), bw=unif(ks[3], (C,), I),
        gamma=jax.random.uniform(ks[4], (C,), jnp.float32, 0.5, 1.5),
        beta=jax.random.uniform(ks[5], (C,), jnp.float32, -0.5, 0.5),
        mean=jax.random.uniform(ks[6], (C,), jnp.float32, -0.2, 0.2),
        var=jax.random.uniform(ks[7], (C,), jnp.float32, 0.5, 1.5),
    )


if __name__ == "__main__":
    # v: (B0, B1, H, C) with in_channels = C; txtD: (B0, B1, H, Dt); inter_channels = I.
    B0, B1, H, C, I, Dt = 2, 3, 16, 8, 4, 8
    key = jax.random.PRNGKey(0)
    kv, kt, kp = jax.random.split(key, 3)
    v = jax.random.normal(kv, (B0, B1, H, C), jnp.float32)
    txtD = jax.random.normal(kt, (B0, B1, H, Dt), jnp.float32)
    params = make_params(kp, C, I)

    # f32 inputs (module default): kernel keeps native dtype end to end.
    out = jax.block_until_ready(rs_gcns_forward(v, txtD, params))
    ref = rs_gcns_reference(v, txtD, params)
    assert out.shape == (B0, B1, H, C)
    assert out.dtype == v.dtype
    # bf16 MXU operands (f32 accumulate) -> looser tolerance vs. the pure-f32 reference.
    assert jnp.allclose(out, ref, rtol=3e-2, atol=3e-2), "f32 mismatch vs. pure-JAX reference"

    # bf16 inputs exercise the no-upcast path (bf16 blocks in and out of the kernel).
    v16 = v.astype(jnp.bfloat16)
    t16 = txtD.astype(jnp.bfloat16)
    out16 = jax.block_until_ready(rs_gcns_forward(v16, t16, params))
    ref16 = rs_gcns_reference(v16.astype(jnp.float32), t16.astype(jnp.float32), params)
    assert out16.dtype == jnp.bfloat16
    assert jnp.allclose(out16.astype(jnp.float32), ref16, rtol=6e-2, atol=6e-2), \
        "bf16 mismatch vs. pure-JAX reference"
    print("KERNEL_OK")
</pallas_src>

<mosaic_0001>
module attributes {stable_mosaic.version = 11 : i64} {
  func.func @kernel(%arg0: i32, %arg1: memref<3x16x128xf32, #tpu.memory_space<vmem>>, %arg2: memref<3x16x128xf32, #tpu.memory_space<vmem>>, %arg3: memref<128x128xbf16, #tpu.memory_space<vmem>>, %arg4: memref<1x128xf32, #tpu.memory_space<vmem>>, %arg5: memref<128x128xbf16, #tpu.memory_space<vmem>>, %arg6: memref<1x128xf32, #tpu.memory_space<vmem>>, %arg7: memref<3x16x128xf32, #tpu.memory_space<vmem>>) attributes {dimension_semantics = [#tpu.dimension_semantics<parallel>], iteration_bounds = array<i64: 2>, scalar_prefetch = 0 : i64, scratch_operands = 0 : i64, tpu.core_type = #tpu.core_type<tc>, window_params = [{transform_indices = @transform_0, window_bounds = array<i64: 3, 16, 128>}, {transform_indices = @transform_1, window_bounds = array<i64: 3, 16, 128>}, {pipeline_mode = #tpu.pipeline_mode<synchronous>, transform_indices = @transform_2, window_bounds = array<i64: 128, 128>}, {pipeline_mode = #tpu.pipeline_mode<synchronous>, transform_indices = @transform_3, window_bounds = array<i64: 1, 128>}, {pipeline_mode = #tpu.pipeline_mode<synchronous>, transform_indices = @transform_4, window_bounds = array<i64: 128, 128>}, {pipeline_mode = #tpu.pipeline_mode<synchronous>, transform_indices = @transform_5, window_bounds = array<i64: 1, 128>}, {transform_indices = @transform_6, window_bounds = array<i64: 3, 16, 128>}]} {
    %c0 = arith.constant 0 : index
    %c0_0 = arith.constant 0 : index
    %c0_1 = arith.constant 0 : index
    %0 = vector.load %arg1[%c0, %c0_0, %c0_1] : memref<3x16x128xf32, #tpu.memory_space<vmem>>, vector<3x16x128xf32>
    %1 = vector.shape_cast %0 : vector<3x16x128xf32> to vector<48x128xf32>
    %2 = arith.truncf %1 : vector<48x128xf32> to vector<48x128xbf16>
    %c0_2 = arith.constant 0 : index
    %c0_3 = arith.constant 0 : index
    %3 = vector.load %arg3[%c0_2, %c0_3] : memref<128x128xbf16, #tpu.memory_space<vmem>>, vector<128x128xbf16>
    %cst = arith.constant dense<0.000000e+00> : vector<48x128xf32>
    %4 = tpu.matmul %2, %3, %cst {dimension_numbers = #tpu.dot_dimension_numbers<[1], [0], [0], [1], [0, 0, 1, 1], [], []>} : vector<48x128xbf16>, vector<128x128xbf16>, vector<48x128xf32> -> vector<48x128xf32>
    %c0_4 = arith.constant 0 : index
    %c0_5 = arith.constant 0 : index
    %5 = vector.load %arg4[%c0_4, %c0_5] : memref<1x128xf32, #tpu.memory_space<vmem>>, vector<1x128xf32>
    %6 = vector.broadcast %5 : vector<1x128xf32> to vector<48x128xf32>
    %7 = arith.addf %4, %6 : vector<48x128xf32>
    %8 = vector.shape_cast %7 : vector<48x128xf32> to vector<3x16x128xf32>
    %c0_6 = arith.constant 0 : index
    %c0_7 = arith.constant 0 : index
    %c0_8 = arith.constant 0 : index
    %9 = vector.load %arg2[%c0_6, %c0_7, %c0_8] : memref<3x16x128xf32, #tpu.memory_space<vmem>>, vector<3x16x128xf32>
    %10 = arith.mulf %9, %9 : vector<3x16x128xf32>
    %cst_9 = arith.constant dense<0.000000e+00> : vector<3x16xf32>
    %11 = vector.multi_reduction <add>, %10, %cst_9 [2] : vector<3x16x128xf32> to vector<3x16xf32>
    %12 = vector.shape_cast %11 : vector<3x16xf32> to vector<3x16x1xf32>
    %13 = math.sqrt %12 : vector<3x16x1xf32>
    %cst_10 = arith.constant 9.99999993E-9 : f32
    %14 = vector.broadcast %cst_10 : f32 to vector<3x16x1xf32>
    %15 = arith.addf %13, %14 : vector<3x16x1xf32>
    %cst_11 = arith.constant 1.000000e+00 : f32
    %16 = vector.broadcast %cst_11 : f32 to vector<3x16x1xf32>
    %17 = arith.divf %16, %15 : vector<3x16x1xf32>
    %18 = vector.broadcast %17 : vector<3x16x1xf32> to vector<3x16x128xf32>
    %19 = arith.mulf %9, %18 : vector<3x16x128xf32>
    %20 = arith.truncf %19 : vector<3x16x128xf32> to vector<3x16x128xbf16>
    %21 = arith.truncf %8 : vector<3x16x128xf32> to vector<3x16x128xbf16>
    "tpu.trace_start"() <{level = 10 : i32, message = "bqd,bkd->bqk"}> : () -> ()
    %cst_12 = arith.constant dense<0.000000e+00> : vector<3x16x16xf32>
    %22 = tpu.matmul %20, %20, %cst_12 {dimension_numbers = #tpu.dot_dimension_numbers<[2], [2], [1], [1], [0, 0, 0, 1, 1, 1], [0], [0]>} : vector<3x16x128xbf16>, vector<3x16x128xbf16>, vector<3x16x16xf32> -> vector<3x16x16xf32>
    "tpu.trace_stop"() : () -> ()
    %23 = arith.truncf %22 : vector<3x16x16xf32> to vector<3x16x16xbf16>
    "tpu.trace_start"() <{level = 10 : i32, message = "bqk,bki->bqi"}> : () -> ()
    %cst_13 = arith.constant dense<0.000000e+00> : vector<3x16x128xf32>
    %24 = tpu.matmul %23, %21, %cst_13 {dimension_numbers = #tpu.dot_dimension_numbers<[2], [1], [1], [2], [0, 0, 0, 1, 1, 2], [0], [0]>} : vector<3x16x16xbf16>, vector<3x16x128xbf16>, vector<3x16x128xf32> -> vector<3x16x128xf32>
    "tpu.trace_stop"() : () -> ()
    %25 = vector.shape_cast %24 : vector<3x16x128xf32> to vector<48x128xf32>
    %26 = arith.truncf %25 : vector<48x128xf32> to vector<48x128xbf16>
    %c0_14 = arith.constant 0 : index
    %c0_15 = arith.constant 0 : index
    %27 = vector.load %arg5[%c0_14, %c0_15] : memref<128x128xbf16, #tpu.memory_space<vmem>>, vector<128x128xbf16>
    %cst_16 = arith.constant dense<0.000000e+00> : vector<48x128xf32>
    %28 = tpu.matmul %26, %27, %cst_16 {dimension_numbers = #tpu.dot_dimension_numbers<[1], [0], [0], [1], [0, 0, 1, 1], [], []>} : vector<48x128xbf16>, vector<128x128xbf16>, vector<48x128xf32> -> vector<48x128xf32>
    %c0_17 = arith.constant 0 : index
    %c0_18 = arith.constant 0 : index
    %29 = vector.load %arg6[%c0_17, %c0_18] : memref<1x128xf32, #tpu.memory_space<vmem>>, vector<1x128xf32>
    %30 = vector.broadcast %29 : vector<1x128xf32> to vector<48x128xf32>
    %31 = arith.addf %28, %30 : vector<48x128xf32>
    %32 = vector.shape_cast %31 : vector<48x128xf32> to vector<3x16x128xf32>
    %33 = arith.addf %32, %0 : vector<3x16x128xf32>
    %c0_19 = arith.constant 0 : index
    %c0_20 = arith.constant 0 : index
    %c0_21 = arith.constant 0 : index
    %34 = vector.load %arg7[%c0_19, %c0_20, %c0_21] : memref<3x16x128xf32, #tpu.memory_space<vmem>>, vector<3x16x128xf32>
    tpu.vector_store %arg7[%c0_19, %c0_20, %c0_21], %33 {strides = array<i32>} : memref<3x16x128xf32, #tpu.memory_space<vmem>>, vector<3x16x128xf32>,
    return
  }
  func.func @transform_0(%arg0: i32) -> (i32, i32, i32) {
    %c0_i32 = arith.constant 0 : i32
    %c0_i32_0 = arith.constant 0 : i32
    %c0_i32_1 = arith.constant 0 : i32
    return %arg0, %c0_i32, %c0_i32_0 : i32, i32, i32
  }
  func.func @transform_1(%arg0: i32) -> (i32, i32, i32) {
    %c0_i32 = arith.constant 0 : i32
    %c0_i32_0 = arith.constant 0 : i32
    %c0_i32_1 = arith.constant 0 : i32
    return %arg0, %c0_i32, %c0_i32_0 : i32, i32, i32
  }
  func.func @transform_2(%arg0: i32) -> (i32, i32) {
    %c0_i32 = arith.constant 0 : i32
    %c0_i32_0 = arith.constant 0 : i32
    %c0_i32_1 = arith.constant 0 : i32
    return %c0_i32, %c0_i32_0 : i32, i32
  }
  func.func @transform_3(%arg0: i32) -> (i32, i32) {
    %c0_i32 = arith.constant 0 : i32
    %c0_i32_0 = arith.constant 0 : i32
    %c0_i32_1 = arith.constant 0 : i32
    return %c0_i32, %c0_i32_0 : i32, i32
  }
  func.func @transform_4(%arg0: i32) -> (i32, i32) {
    %c0_i32 = arith.constant 0 : i32
    %c0_i32_0 = arith.constant 0 : i32
    %c0_i32_1 = arith.constant 0 : i32
    return %c0_i32, %c0_i32_0 : i32, i32
  }
  func.func @transform_5(%arg0: i32) -> (i32, i32) {
    %c0_i32 = arith.constant 0 : i32
    %c0_i32_0 = arith.constant 0 : i32
    %c0_i32_1 = arith.constant 0 : i32
    return %c0_i32, %c0_i32_0 : i32, i32
  }
  func.func @transform_6(%arg0: i32) -> (i32, i32, i32) {
    %c0_i32 = arith.constant 0 : i32
    %c0_i32_0 = arith.constant 0 : i32
    %c0_i32_1 = arith.constant 0 : i32
    return %arg0, %c0_i32, %c0_i32_0 : i32, i32, i32
  }
}

</mosaic_0001>

<llo_original>
// kernel: tpu_custom_call.1
$region0: #{tpu_custom_call.1}
  #allocation0 [shape = 'u32[]', space=smem, size = 0x4, offset = 0x4, fixed_abs, tag = 'smem constant byte address 0x4 - core index']
  #allocation1 [shape = 'u32[72,128]{1,0:T(1,128)}', space=vmem, size = 0x9000, scoped, tag = 'internal scratch']
  %s0 = inlined_call_operand.hbm [shape: f32[6,16,128], index: 0, kind: input, shape index: {}, may-alias: {0,6}]
  %s1 = inlined_call_operand.vmem [shape: f32[6,16,128], index: 1, kind: input, shape index: {}]
  %s2 = inlined_call_operand.vmem [shape: bf16[128,128], index: 2, kind: input, shape index: {}]
  %s3 = inlined_call_operand.vmem [shape: f32[1,128], index: 3, kind: input, shape index: {}]
  %s4 = inlined_call_operand.hbm [shape: bf16[128,128], index: 4, kind: input, shape index: {}]
  %s5 = inlined_call_operand.vmem [shape: f32[1,128], index: 5, kind: input, shape index: {}]
  %s6 = inlined_call_operand.hbm [shape: f32[6,16,128], index: 6, kind: output, shape index: {}, may-alias: {0,6}]
  %s7 = sld [smem:[#allocation0]]
  $region65: #{tpu_custom_call.1} parent=0
    _
  %s9 = ssub.s32 1, %s7
  %s10 = scalar_select 0, %s9, %s7
  $region1: #{tpu_custom_call.1} parent=0
    #allocation2 [shape = 'u8[49152]{0}', space=vmem, size = 0xc000, scoped, tag = 'input window, operand 0']
    #allocation3 [shape = 's32[2]{0}', space=sflag, size = 0x8, scoped, tag = 'scoped memory for tpu_custom_call.1']
    #allocation4 [shape = 's32[2]{0}', space=sflag, size = 0x8, scoped, tag = 'scoped memory for tpu_custom_call.1']
    #allocation5 [shape = 'u8[32768]{0}', space=vmem, size = 0x8000, scoped, tag = 'input window, operand 4, single buffered']
    #allocation6 [shape = 's32[1]{0}', space=sflag, size = 0x4, scoped, tag = 'scoped memory for tpu_custom_call.1']
    #allocation7 [shape = 'u8[49152]{0}', space=vmem, size = 0xc000, scoped, tag = 'output window, operand 0']
    %11 = vsyncpa [#allocation3], 0
    %s12 = scalar_lea.sflag [#allocation3], 1
    %13 = vsyncpa %s12, 0
    %14 = vsyncpa [#allocation6], 0
    %15 = vsyncpa [#allocation4], 0
    %s16 = scalar_lea.sflag [#allocation4], 1
    %17 = vsyncpa %s16, 0
    loop: start=0, step=1, limit=4
    $region2: #{tpu_custom_call.1} parent=1 // loop_pre_header
      _
    $region3: #{tpu_custom_call.1} parent=1 // loop_header
      %s19 = sphi 0, %s23
      %p20 = scmp.ge.s32.totalorder %s19, 4
      %s29 = sphi 0, %s31
      %s32 = sphi 0, %s29
      %s33 = sphi 0, %s32
      %s49 = sphi 0, %s33
      %s55 = sphi 0, %s57
      %s58 = sphi 0, %s55
      %s59 = sphi 0, %s58
      %s75 = sphi 0, %s59
      %s79 = sphi 0, %s79
      %s81 = sphi 0, %s79
      %s82 = sphi 0, %s81
      %s96 = sphi 0, %s82
      %s100 = sphi 0, %s100
      %s102 = sphi 0, %s100
      %s103 = sphi 0, %s102
      %s117 = sphi 0, %s103
      %s121 = sphi 0, %s121
      %s123 = sphi 0, %s121
      %s124 = sphi 0, %s123
      %s138 = sphi 0, %s124
      %s142 = sphi 0, %s142
      %s144 = sphi 0, %s142
      %s145 = sphi 0, %s144
      %s159 = sphi 0, %s145
      %s165 = sphi 0, %s167
      %s168 = sphi 0, %s165
      %s169 = sphi 0, %s168
      %s185 = sphi 0, %s169
    $region4: #{tpu_custom_call.1} parent=1 // loop_header_branch
      %22 = sbr.rel (%p20) target = $region8
    $region5: #{tpu_custom_call.1} parent=1 // loop_body
      %s24 = ssub.s32 %s19, 1
      %s25 = ssub.s32 %s19, 2
      %s26 = sadd.s32 %s19, 1
      %s27 = ssub.s32 %s19, %s26
      %p28 = scmp.eq.s32.totalorder %s27, 0
      %s30 = sadd.s32 %s29, 1
      %s31 = scalar_select %p28, %s29, %s30
      %p34 = pneg %p28
      %p35 = scmp.eq.s32.totalorder %s19, 1
      %p36 = por %p34, %p35
      %p37 = scmp.ne.s32.totalorder %s29, %s32
      %p38 = scmp.eq.s32.totalorder %s19, 0
      %p39 = por %p37, %p38
      %p40 = scmp.ne.s32.totalorder %s29, %s32
      %p41 = scmp.eq.s32.totalorder %s24, 1
      %p42 = por %p40, %p41
      %p43 = scmp.ne.s32.totalorder %s32, %s33
      %p44 = scmp.eq.s32.totalorder %s24, 0
      %p45 = por %p43, %p44
      %p46 = scmp.ne.s32.totalorder %s32, %s33
      %p47 = scmp.eq.s32.totalorder %s25, 1
      %p48 = por %p46, %p47
      %p50 = scmp.ne.s32.totalorder %s33, %s49
      %p51 = scmp.eq.s32.totalorder %s25, 0
      %p52 = por %p50, %p51
      %s53 = ssub.s32 %s19, %s26
      %p54 = scmp.eq.s32.totalorder %s53, 0
      %s56 = sadd.s32 %s55, 1
      %s57 = scalar_select %p54, %s55, %s56
      %p60 = pneg %p54
      %p61 = scmp.eq.s32.totalorder %s19, 1
      %p62 = por %p60, %p61
      %p63 = scmp.ne.s32.totalorder %s55, %s58
      %p64 = scmp.eq.s32.totalorder %s19, 0
      %p65 = por %p63, %p64
      %p66 = scmp.ne.s32.totalorder %s55, %s58
      %p67 = scmp.eq.s32.totalorder %s24, 1
      %p68 = por %p66, %p67
      %p69 = scmp.ne.s32.totalorder %s58, %s59
      %p70 = scmp.eq.s32.totalorder %s24, 0
      %p71 = por %p69, %p70
      %p72 = scmp.ne.s32.totalorder %s58, %s59
      %p73 = scmp.eq.s32.totalorder %s25, 1
      %p74 = por %p72, %p73
      %p76 = scmp.ne.s32.totalorder %s59, %s75
      %p77 = scmp.eq.s32.totalorder %s25, 0
      %p78 = por %p76, %p77
      %s80 = sadd.s32 %s79, 1
      %p83 = scmp.eq.s32.totalorder %s19, 1
      %p84 = scmp.ne.s32.totalorder %s79, %s81
      %p85 = scmp.eq.s32.totalorder %s19, 0
      %p86 = por %p84, %p85
      %p87 = scmp.ne.s32.totalorder %s79, %s81
      %p88 = scmp.eq.s32.totalorder %s24, 1
      %p89 = por %p87, %p88
      %p90 = scmp.ne.s32.totalorder %s81, %s82
      %p91 = scmp.eq.s32.totalorder %s24, 0
      %p92 = por %p90, %p91
      %p93 = scmp.ne.s32.totalorder %s81, %s82
      %p94 = scmp.eq.s32.totalorder %s25, 1
      %p95 = por %p93, %p94
      %p97 = scmp.ne.s32.totalorder %s82, %s96
      %p98 = scmp.eq.s32.totalorder %s25, 0
      %p99 = por %p97, %p98
      %s101 = sadd.s32 %s100, 1
      %p104 = scmp.eq.s32.totalorder %s19, 1
      %p105 = scmp.ne.s32.totalorder %s100, %s102
      %p106 = scmp.eq.s32.totalorder %s19, 0
      %p107 = por %p105, %p106
      %p108 = scmp.ne.s32.totalorder %s100, %s102
      %p109 = scmp.eq.s32.totalorder %s24, 1
      %p110 = por %p108, %p109
      %p111 = scmp.ne.s32.totalorder %s102, %s103
      %p112 = scmp.eq.s32.totalorder %s24, 0
      %p113 = por %p111, %p112
      %p114 = scmp.ne.s32.totalorder %s102, %s103
      %p115 = scmp.eq.s32.totalorder %s25, 1
      %p116 = por %p114, %p115
      %p118 = scmp.ne.s32.totalorder %s103, %s117
      %p119 = scmp.eq.s32.totalorder %s25, 0
      %p120 = por %p118, %p119
      %s122 = sadd.s32 %s121, 1
      %p125 = scmp.eq.s32.totalorder %s19, 1
      %p126 = scmp.ne.s32.totalorder %s121, %s123
      %p127 = scmp.eq.s32.totalorder %s19, 0
      %p128 = por %p126, %p127
      %p129 = scmp.ne.s32.totalorder %s121, %s123
      %p130 = scmp.eq.s32.totalorder %s24, 1
      %p131 = por %p129, %p130
      %p132 = scmp.ne.s32.totalorder %s123, %s124
      %p133 = scmp.eq.s32.totalorder %s24, 0
      %p134 = por %p132, %p133
      %p135 = scmp.ne.s32.totalorder %s123, %s124
      %p136 = scmp.eq.s32.totalorder %s25, 1
      %p137 = por %p135, %p136
      %p139 = scmp.ne.s32.totalorder %s124, %s138
      %p140 = scmp.eq.s32.totalorder %s25, 0
      %p141 = por %p139, %p140
      %s143 = sadd.s32 %s142, 1
      %p146 = scmp.eq.s32.totalorder %s19, 1
      %p147 = scmp.ne.s32.totalorder %s142, %s144
      %p148 = scmp.eq.s32.totalorder %s19, 0
      %p149 = por %p147, %p148
      %p150 = scmp.ne.s32.totalorder %s142, %s144
      %p151 = scmp.eq.s32.totalorder %s24, 1
      %p152 = por %p150, %p151
      %p153 = scmp.ne.s32.totalorder %s144, %s145
      %p154 = scmp.eq.s32.totalorder %s24, 0
      %p155 = por %p153, %p154
      %p156 = scmp.ne.s32.totalorder %s144, %s145
      %p157 = scmp.eq.s32.totalorder %s25, 1
      %p158 = por %p156, %p157
      %p160 = scmp.ne.s32.totalorder %s145, %s159
      %p161 = scmp.eq.s32.totalorder %s25, 0
      %p162 = por %p160, %p161
      %s163 = ssub.s32 %s19, %s26
      %p164 = scmp.eq.s32.totalorder %s163, 0
      %s166 = sadd.s32 %s165, 1
      %s167 = scalar_select %p164, %s165, %s166
      %p170 = pneg %p164
      %p171 = scmp.eq.s32.totalorder %s19, 1
      %p172 = por %p170, %p171
      %p173 = scmp.ne.s32.totalorder %s165, %s168
      %p174 = scmp.eq.s32.totalorder %s19, 0
      %p175 = por %p173, %p174
      %p176 = scmp.ne.s32.totalorder %s165, %s168
      %p177 = scmp.eq.s32.totalorder %s24, 1
      %p178 = por %p176, %p177
      %p179 = scmp.ne.s32.totalorder %s168, %s169
      %p180 = scmp.eq.s32.totalorder %s24, 0
      %p181 = por %p179, %p180
      %p182 = scmp.ne.s32.totalorder %s168, %s169
      %p183 = scmp.eq.s32.totalorder %s25, 1
      %p184 = por %p182, %p183
      %p186 = scmp.ne.s32.totalorder %s169, %s185
      %p187 = scmp.eq.s32.totalorder %s25, 0
      %p188 = por %p186, %p187
      %p189 = scmp.le.s32.totalorder 1, %s19
      %p190 = scmp.lt.s32.totalorder %s19, 3
      %p191 = pnand %p189, %p190
      %p192 = pneg %p191
      // Predicated region
      $region9: #{tpu_custom_call.1} parent=5 // pred_check
        _
      $region10: #{tpu_custom_call.1} parent=5 // pred_check_branch
        %194 = sbr.rel (%p191) target = $region12
      $region11: #{tpu_custom_call.1} parent=5 // pred_region
        %s195 = ssub.s32 %s19, 1
        // Predicated region
        $region13: #{tpu_custom_call.1} parent=11 // pred_check
          %p196 = pneg %p92
        $region14: #{tpu_custom_call.1} parent=11 // pred_check_branch
          %198 = sbr.rel (%p196) target = $region16
        $region15: #{tpu_custom_call.1} parent=11 // pred_region
          _
        $region16: #{tpu_custom_call.1} parent=11 // pred_fallthru
          _
        // Predicated region
        $region17: #{tpu_custom_call.1} parent=11 // pred_check
          %p199 = pneg %p113
        $region18: #{tpu_custom_call.1} parent=11 // pred_check_branch
          %201 = sbr.rel (%p199) target = $region20
        $region19: #{tpu_custom_call.1} parent=11 // pred_region
          _
        $region20: #{tpu_custom_call.1} parent=11 // pred_fallthru
          _
        // Predicated region
        $region21: #{tpu_custom_call.1} parent=11 // pred_check
          %p202 = pneg %p134
        $region22: #{tpu_custom_call.1} parent=11 // pred_check_branch
          %204 = sbr.rel (%p202) target = $region24
        $region23: #{tpu_custom_call.1} parent=11 // pred_region
          %206 = vsyncadd [#allocation6], 0
          %s207 = sshll.u32 %s4, 4
          %s208 = int_to_ptr.hbm [resolvable:$true] %s207
          %s209 = sshll.u32 [#allocation5], 4
          %s210 = int_to_ptr.vmem [resolvable:$true] %s209
          %215 = dma.hbm_to_vmem [thread:$0]  %s208, 1024, %s210, [#allocation6], 64, 64, 4
        $region24: #{tpu_custom_call.1} parent=11 // pred_fallthru
          _
        // Predicated region
        $region25: #{tpu_custom_call.1} parent=11 // pred_check
          %p216 = pneg %p155
        $region26: #{tpu_custom_call.1} parent=11 // pred_check_branch
          %218 = sbr.rel (%p216) target = $region28
        $region27: #{tpu_custom_call.1} parent=11 // pred_region
          _
        $region28: #{tpu_custom_call.1} parent=11 // pred_fallthru
          _
      $region12: #{tpu_custom_call.1} parent=5 // pred_fallthru
        _
      %p219 = scmp.lt.s32.totalorder %s19, 2
      // Predicated region
      $region29: #{tpu_custom_call.1} parent=5 // pred_check
        %p220 = pneg %p219
      $region30: #{tpu_custom_call.1} parent=5 // pred_check_branch
        %222 = sbr.rel (%p220) target = $region32
      $region31: #{tpu_custom_call.1} parent=5 // pred_region
        // Predicated region
        $region33: #{tpu_custom_call.1} parent=31 // pred_check
          %p223 = pneg %p39
        $region34: #{tpu_custom_call.1} parent=31 // pred_check_branch
          %225 = sbr.rel (%p223) target = $region36
        $region35: #{tpu_custom_call.1} parent=31 // pred_region
          %s226 = sand.u32 %s29, 1
          %s227 = scalar_lea.sflag [#allocation3], %s226
          %s228 = sand.u32 %s29, 1
          %s229 = smul.addr %s228, 48
          %s230 = scalar_lea.vmem [#allocation2], %s229
          %s231 = smul.u32 3, %s19
          %233 = vsyncadd %s227, 0
          %s234 = smul.addr %s231, 2
          %s235 = smul.addr %s234, 8
          %s236 = scalar_lea.hbm %s0, %s235
          %s237 = sshll.u32 %s236, 4
          %s238 = int_to_ptr.hbm [resolvable:$true] %s237
          %s239 = sshll.u32 %s230, 4
          %s240 = int_to_ptr.vmem [resolvable:$true] %s239
          %245 = dma.hbm_to_vmem [thread:$0]  %s238, 768, %s240, %s227, 128, 128, 8
        $region36: #{tpu_custom_call.1} parent=31 // pred_fallthru
          _
        // Predicated region
        $region37: #{tpu_custom_call.1} parent=31 // pred_check
          %p246 = pneg %p65
        $region38: #{tpu_custom_call.1} parent=31 // pred_check_branch
          %248 = sbr.rel (%p246) target = $region40
        $region39: #{tpu_custom_call.1} parent=31 // pred_region
          %s249 = smul.u32 3, %s19
          %p250 = scmp.lt.s32.totalorder %s249, 5
          %s251 = scalar_select %p250, %s249, 5
          %s252 = smul.addr %s251, 2
          %s253 = smul.addr %s252, 8
          %s254 = scalar_lea.vmem %s1, %s253
          %s255 = smul.u32 3, %s19
        $region40: #{tpu_custom_call.1} parent=31 // pred_fallthru
          _
      $region32: #{tpu_custom_call.1} parent=5 // pred_fallthru
        _
      %p256 = scmp.le.s32.totalorder 1, %s19
      %p257 = scmp.lt.s32.totalorder %s19, 3
      %p258 = pnand %p256, %p257
      %p259 = pneg %p258
      // Predicated region
      $region41: #{tpu_custom_call.1} parent=5 // pred_check
        _
      $region42: #{tpu_custom_call.1} parent=5 // pred_check_branch
        %261 = sbr.rel (%p258) target = $region44
      $region43: #{tpu_custom_call.1} parent=5 // pred_region
        %s262 = ssub.s32 %s19, 1
        %s263 = sand.u32 %s32, 1
        %s264 = scalar_lea.sflag [#allocation3], %s263
        %s265 = sand.u32 %s32, 1
        %s266 = smul.addr %s265, 48
        %s267 = scalar_lea.vmem [#allocation2], %s266
        // Predicated region
        $region45: #{tpu_custom_call.1} parent=43 // pred_check
          %p268 = pneg %p45
        $region46: #{tpu_custom_call.1} parent=43 // pred_check_branch
          %270 = sbr.rel (%p268) target = $region48
        $region47: #{tpu_custom_call.1} parent=43 // pred_region
          %272 = dma.done %s264, 768
        $region48: #{tpu_custom_call.1} parent=43 // pred_fallthru
          _
        // Predicated region
        $region49: #{tpu_custom_call.1} parent=43 // pred_check
          %p273 = pneg %p134
        $region50: #{tpu_custom_call.1} parent=43 // pred_check_branch
          %275 = sbr.rel (%p273) target = $region52
        $region51: #{tpu_custom_call.1} parent=43 // pred_region
          %277 = dma.done [#allocation6], 1024
        $region52: #{tpu_custom_call.1} parent=43 // pred_fallthru
          _
        %s278 = sand.u32 %s32, 1
        %s279 = scalar_lea.sflag [#allocation3], %s278
        %s280 = sand.u32 %s32, 1
        %s281 = smul.addr %s280, 48
        %s282 = scalar_lea.vmem [#allocation2], %s281
        %p283 = pneg %p45
        %p284 = pneg %p42
        %s285 = smul.u32 3, %s24
        %p286 = scmp.lt.s32.totalorder %s285, 5
        %s287 = scalar_select %p286, %s285, 5
        %s288 = smul.addr %s287, 2
        %s289 = smul.addr %s288, 8
        %s290 = scalar_lea.vmem %s1, %s289
        %p291 = pneg %p71
        %p292 = pneg %p68
        %p293 = pneg %p92
        %p294 = pneg %p89
        %p295 = pneg %p113
        %p296 = pneg %p110
        %p297 = pneg %p134
        %p298 = pneg %p131
        %p299 = pneg %p155
        %p300 = pneg %p152
        %p301 = pneg %p181
        %p302 = pneg %p178
        %s303 = sand.u32 %s168, 1
        %s304 = scalar_lea.sflag [#allocation4], %s303
        %s305 = sand.u32 %s168, 1
        %s306 = smul.addr %s305, 48
        %s307 = scalar_lea.vmem [#allocation7], %s306
        %s308 = smul.u32 3, %s24
        %s309 = smul.u32 3, %s24
        %p310 = scmp.lt.s32.totalorder %s309, 5
        %s311 = scalar_select %p310, %s309, 5
        %s312 = smul.addr %s311, 2
        %s313 = smul.addr %s312, 8
        %s314 = scalar_lea.vmem %s1, %s313
        %s315 = smul.u32 3, %s24
        %s316 = smul.u32 3, %s24
        %v318 = vld [vmem:[%s267] sm:$0xff]
        %v319 = vld [vmem:[%s267 + $0x8] sm:$0xff]
        %v320 = vld [vmem:[%s267 + $0x10] sm:$0xff]
        %v321 = vld [vmem:[%s267 + $0x18] sm:$0xff]
        %v322 = vld [vmem:[%s267 + $0x20] sm:$0xff]
        %v323 = vld [vmem:[%s267 + $0x28] sm:$0xff]
        %v324 = vpack.c.bf16 %v319, %v318
        %v325 = vpack.c.bf16 %v321, %v320
        %v326 = vpack.c.bf16 %v323, %v322
        %v327 = vld [vmem:[%s2] sm:$0xf]
        %v328 = vld [vmem:[%s2 + $0x4] sm:$0xf]
        %v329 = vld [vmem:[%s2 + $0x8] sm:$0xf]
        %v330 = vld [vmem:[%s2 + $0xc] sm:$0xf]
        %v331 = vld [vmem:[%s2 + $0x10] sm:$0xf]
        %v332 = vld [vmem:[%s2 + $0x14] sm:$0xf]
        %v333 = vld [vmem:[%s2 + $0x18] sm:$0xf]
        %v334 = vld [vmem:[%s2 + $0x1c] sm:$0xf]
        %v335 = vld [vmem:[%s2 + $0x20] sm:$0xf]
        %v336 = vld [vmem:[%s2 + $0x24] sm:$0xf]
        %v337 = vld [vmem:[%s2 + $0x28] sm:$0xf]
        %v338 = vld [vmem:[%s2 + $0x2c] sm:$0xf]
        %v339 = vld [vmem:[%s2 + $0x30] sm:$0xf]
        %v340 = vld [vmem:[%s2 + $0x34] sm:$0xf]
        %v341 = vld [vmem:[%s2 + $0x38] sm:$0xf]
        %v342 = vld [vmem:[%s2 + $0x3c] sm:$0xf]
        %v343 = vld [vmem:[%s3] sm:$0x1]
        %v345 = vperm.slane %v343, 0
        %v363 = vunpack.c.l.b16 %v327
        %v364 = vunpack.c.l.b16 %v328
        %v365 = vunpack.c.l.b16 %v329
        %v366 = vunpack.c.l.b16 %v330
        %v367 = vunpack.c.l.b16 %v331
        %v368 = vunpack.c.l.b16 %v332
        %v369 = vunpack.c.l.b16 %v333
        %v370 = vunpack.c.l.b16 %v334
        %v371 = vunpack.c.l.b16 %v335
        %v372 = vunpack.c.l.b16 %v336
        %v373 = vunpack.c.l.b16 %v337
        %v374 = vunpack.c.l.b16 %v338
        %v375 = vunpack.c.l.b16 %v339
        %v376 = vunpack.c.l.b16 %v340
        %v377 = vunpack.c.l.b16 %v341
        %v378 = vunpack.c.l.b16 %v342
        %v379 = vpack.c.b16 %v364, %v363
        %v380 = vpack.c.b16 %v366, %v365
        %v381 = vpack.c.b16 %v368, %v367
        %v382 = vpack.c.b16 %v370, %v369
        %v383 = vpack.c.b16 %v372, %v371
        %v384 = vpack.c.b16 %v374, %v373
        %v385 = vpack.c.b16 %v376, %v375
        %v386 = vpack.c.b16 %v378, %v377
        %395 = vmatpush.bf16.msra.mxu0 %v386
        %396 = vmatpush.bf16.msra.mxu0 %v385
        %397 = vmatpush.bf16.msra.mxu0 %v384
        %398 = vmatpush.bf16.msra.mxu0 %v383
        %399 = vmatpush.bf16.msra.mxu0 %v382
        %400 = vmatpush.bf16.msra.mxu0 %v381
        %401 = vmatpush.bf16.msra.mxu0 %v380
        %402 = vmatpush.bf16.msra.mxu0 %v379
        %403 = vmatmul.bf16.gmra.mxu0 %v324
        %v404 = vpop.f32.mrf.mxu0
        %v405 = vadd.f32 %v345, %v404
        %v406 = vpop.f32.mrf.mxu0
        %v407 = vadd.f32 %v345, %v406
        %408 = vmatmul.bf16.gmra.mxu0 %v325
        %v409 = vpop.f32.mrf.mxu0
        %v410 = vadd.f32 %v345, %v409
        %v411 = vpop.f32.mrf.mxu0
        %v412 = vadd.f32 %v345, %v411
        %413 = vmatmul.bf16.gmra.mxu0 %v326
        %v414 = vpop.f32.mrf.mxu0
        %v415 = vadd.f32 %v345, %v414
        %v416 = vpop.f32.mrf.mxu0
        %v417 = vadd.f32 %v345, %v416
        %418 = vdwg.mxu0
        %v419 = vld [vmem:[%s314] sm:$0xff]
        %v420 = vld [vmem:[%s314 + $0x8] sm:$0xff]
        %v421 = vld [vmem:[%s314 + $0x10] sm:$0xff]
        %v422 = vld [vmem:[%s314 + $0x18] sm:$0xff]
        %v423 = vld [vmem:[%s314 + $0x20] sm:$0xff]
        %v424 = vld [vmem:[%s314 + $0x28] sm:$0xff]
        %v425 = vmul.f32 %v419, %v419
        %v426 = vmul.f32 %v420, %v420
        %v427 = vmul.f32 %v421, %v421
        %v428 = vmul.f32 %v422, %v422
        %v429 = vmul.f32 %v423, %v423
        %v430 = vmul.f32 %v424, %v424
        %431 = vadd.xlane.f32.xlu0 %v425
        %v432 = vpop.xlane.xlu0 %431
        %433 = vadd.xlane.f32.xlu0 %v426
        %v434 = vpop.xlane.xlu0 %433
        %435 = vadd.xlane.f32.xlu0 %v427
        %v436 = vpop.xlane.xlu0 %435
        %437 = vadd.xlane.f32.xlu0 %v428
        %v438 = vpop.xlane.xlu0 %437
        %439 = vadd.xlane.f32.xlu0 %v429
        %v440 = vpop.xlane.xlu0 %439
        %441 = vadd.xlane.f32.xlu0 %v430
        %v442 = vpop.xlane.xlu0 %441
        %v443 = vrsqrt.pop %v432
        %v444 = vmul.f32 %v443, %v432
        %v445 = vmul.f32 %v444, %v443
        %v446 = vmul.f32 0.5, %v445
        %v447 = vsub.f32 1.5, %v446
        %v448 = vmul.f32 %v443, %v447
        %v449 = vmul.f32 %v432, %v448
        %vm450 = vcmp.eq.f32.partialorder %v432, inf
        %v451 = vsel %vm450, %v432, %v449
        %vm452 = vcmp.eq.f32.partialorder %v432, 0.0
        %v453 = vand.u32 %v432, 2147483648
        %v454 = vsel %vm452, %v453, %v451
        %v455 = vrsqrt.pop %v434
        %v456 = vmul.f32 %v455, %v434
        %v457 = vmul.f32 %v456, %v455
        %v458 = vmul.f32 0.5, %v457
        %v459 = vsub.f32 1.5, %v458
        %v460 = vmul.f32 %v455, %v459
        %v461 = vmul.f32 %v434, %v460
        %vm462 = vcmp.eq.f32.partialorder %v434, inf
        %v463 = vsel %vm462, %v434, %v461
        %vm464 = vcmp.eq.f32.partialorder %v434, 0.0
        %v465 = vand.u32 %v434, 2147483648
        %v466 = vsel %vm464, %v465, %v463
        %v467 = vrsqrt.pop %v436
        %v468 = vmul.f32 %v467, %v436
        %v469 = vmul.f32 %v468, %v467
        %v470 = vmul.f32 0.5, %v469
        %v471 = vsub.f32 1.5, %v470
        %v472 = vmul.f32 %v467, %v471
        %v473 = vmul.f32 %v436, %v472
        %vm474 = vcmp.eq.f32.partialorder %v436, inf
        %v475 = vsel %vm474, %v436, %v473
        %vm476 = vcmp.eq.f32.partialorder %v436, 0.0
        %v477 = vand.u32 %v436, 2147483648
        %v478 = vsel %vm476, %v477, %v475
        %v479 = vrsqrt.pop %v438
        %v480 = vmul.f32 %v479, %v438
        %v481 = vmul.f32 %v480, %v479
        %v482 = vmul.f32 0.5, %v481
        %v483 = vsub.f32 1.5, %v482
        %v484 = vmul.f32 %v479, %v483
        %v485 = vmul.f32 %v438, %v484
        %vm486 = vcmp.eq.f32.partialorder %v438, inf
        %v487 = vsel %vm486, %v438, %v485
        %vm488 = vcmp.eq.f32.partialorder %v438, 0.0
        %v489 = vand.u32 %v438, 2147483648
        %v490 = vsel %vm488, %v489, %v487
        %v491 = vrsqrt.pop %v440
        %v492 = vmul.f32 %v491, %v440
        %v493 = vmul.f32 %v492, %v491
        %v494 = vmul.f32 0.5, %v493
        %v495 = vsub.f32 1.5, %v494
        %v496 = vmul.f32 %v491, %v495
        %v497 = vmul.f32 %v440, %v496
        %vm498 = vcmp.eq.f32.partialorder %v440, inf
        %v499 = vsel %vm498, %v440, %v497
        %vm500 = vcmp.eq.f32.partialorder %v440, 0.0
        %v501 = vand.u32 %v440, 2147483648
        %v502 = vsel %vm500, %v501, %v499
        %v503 = vrsqrt.pop %v442
        %v504 = vmul.f32 %v503, %v442
        %v505 = vmul.f32 %v504, %v503
        %v506 = vmul.f32 0.5, %v505
        %v507 = vsub.f32 1.5, %v506
        %v508 = vmul.f32 %v503, %v507
        %v509 = vmul.f32 %v442, %v508
        %vm510 = vcmp.eq.f32.partialorder %v442, inf
        %v511 = vsel %vm510, %v442, %v509
        %vm512 = vcmp.eq.f32.partialorder %v442, 0.0
        %v513 = vand.u32 %v442, 2147483648
        %v514 = vsel %vm512, %v513, %v511
        %v515 = vadd.f32 %v454, 1e-08
        %v516 = vadd.f32 %v466, 1e-08
        %v517 = vadd.f32 %v478, 1e-08
        %v518 = vadd.f32 %v490, 1e-08
        %v519 = vadd.f32 %v502, 1e-08
        %v520 = vadd.f32 %v514, 1e-08
        %v521 = vrcp.pop %v515
        %v522 = vmul.f32 %v515, %v521
        %v523 = vsub.f32 1.0, %v522
        %v524 = vmul.f32 %v521, %v523
        %v525 = vadd.f32 %v521, %v524
        %vm526 = vweird.f32 %v515
        %vm527 = vweird.f32 %v521
        %vm528 = vmor %vm526, %vm527
        %v529 = vsel %vm528, %v521, %v525
        %v530 = vand.u32 2147483647, %v515
        %vm531 = vcmp.eq.f32.partialorder %v530, 8.507059e+37
        %v532 = vand.u32 %v515, 2147483648
        %v533 = vor.u32 1.1754944e-38, %v532
        %v534 = vsel %vm531, %v533, %v529
        %v535 = vmul.f32 1.0, %v534
        %v536 = vrcp.pop %v516
        %v537 = vmul.f32 %v516, %v536
        %v538 = vsub.f32 1.0, %v537
        %v539 = vmul.f32 %v536, %v538
        %v540 = vadd.f32 %v536, %v539
        %vm541 = vweird.f32 %v516
        %vm542 = vweird.f32 %v536
        %vm543 = vmor %vm541, %vm542
        %v544 = vsel %vm543, %v536, %v540
        %v545 = vand.u32 2147483647, %v516
        %vm546 = vcmp.eq.f32.partialorder %v545, 8.507059e+37
        %v547 = vand.u32 %v516, 2147483648
        %v548 = vor.u32 1.1754944e-38, %v547
        %v549 = vsel %vm546, %v548, %v544
        %v550 = vmul.f32 1.0, %v549
        %v551 = vrcp.pop %v517
        %v552 = vmul.f32 %v517, %v551
        %v553 = vsub.f32 1.0, %v552
        %v554 = vmul.f32 %v551, %v553
        %v555 = vadd.f32 %v551, %v554
        %vm556 = vweird.f32 %v517
        %vm557 = vweird.f32 %v551
        %vm558 = vmor %vm556, %vm557
        %v559 = vsel %vm558, %v551, %v555
        %v560 = vand.u32 2147483647, %v517
        %vm561 = vcmp.eq.f32.partialorder %v560, 8.507059e+37
        %v562 = vand.u32 %v517, 2147483648
        %v563 = vor.u32 1.1754944e-38, %v562
        %v564 = vsel %vm561, %v563, %v559
        %v565 = vmul.f32 1.0, %v564
        %v566 = vrcp.pop %v518
        %v567 = vmul.f32 %v518, %v566
        %v568 = vsub.f32 1.0, %v567
        %v569 = vmul.f32 %v566, %v568
        %v570 = vadd.f32 %v566, %v569
        %vm571 = vweird.f32 %v518
        %vm572 = vweird.f32 %v566
        %vm573 = vmor %vm571, %vm572
        %v574 = vsel %vm573, %v566, %v570
        %v575 = vand.u32 2147483647, %v518
        %vm576 = vcmp.eq.f32.partialorder %v575, 8.507059e+37
        %v577 = vand.u32 %v518, 2147483648
        %v578 = vor.u32 1.1754944e-38, %v577
        %v579 = vsel %vm576, %v578, %v574
        %v580 = vmul.f32 1.0, %v579
        %v581 = vrcp.pop %v519
        %v582 = vmul.f32 %v519, %v581
        %v583 = vsub.f32 1.0, %v582
        %v584 = vmul.f32 %v581, %v583
        %v585 = vadd.f32 %v581, %v584
        %vm586 = vweird.f32 %v519
        %vm587 = vweird.f32 %v581
        %vm588 = vmor %vm586, %vm587
        %v589 = vsel %vm588, %v581, %v585
        %v590 = vand.u32 2147483647, %v519
        %vm591 = vcmp.eq.f32.partialorder %v590, 8.507059e+37
        %v592 = vand.u32 %v519, 2147483648
        %v593 = vor.u32 1.1754944e-38, %v592
        %v594 = vsel %vm591, %v593, %v589
        %v595 = vmul.f32 1.0, %v594
        %v596 = vrcp.pop %v520
        %v597 = vmul.f32 %v520, %v596
        %v598 = vsub.f32 1.0, %v597
        %v599 = vmul.f32 %v596, %v598
        %v600 = vadd.f32 %v596, %v599
        %vm601 = vweird.f32 %v520
        %vm602 = vweird.f32 %v596
        %vm603 = vmor %vm601, %vm602
        %v604 = vsel %vm603, %v596, %v600
        %v605 = vand.u32 2147483647, %v520
        %vm606 = vcmp.eq.f32.partialorder %v605, 8.507059e+37
        %v607 = vand.u32 %v520, 2147483648
        %v608 = vor.u32 1.1754944e-38, %v607
        %v609 = vsel %vm606, %v608, %v604
        %v610 = vmul.f32 1.0, %v609
        %v611 = vmul.f32 %v419, %v535
        %v612 = vmul.f32 %v420, %v550
        %v613 = vmul.f32 %v421, %v565
        %v614 = vmul.f32 %v422, %v580
        %v615 = vmul.f32 %v423, %v595
        %v616 = vmul.f32 %v424, %v610
        %v617 = vpack.c.bf16 %v611, %v611
        %v618 = vpack.c.bf16 %v612, %v612
        %v619 = vpack.c.bf16 %v613, %v613
        %v620 = vpack.c.bf16 %v614, %v614
        %v621 = vpack.c.bf16 %v615, %v615
        %v622 = vpack.c.bf16 %v616, %v616
        %v623 = vpack.c.bf16 %v405, %v405
        %v624 = vpack.c.bf16 %v407, %v407
        %v625 = vpack.c.bf16 %v410, %v410
        %v626 = vpack.c.bf16 %v412, %v412
        %v627 = vpack.c.bf16 %v415, %v415
        %v628 = vpack.c.bf16 %v417, %v417
        %v631 = vunpack.c.l.b16 %v617
        %v632 = vunpack.c.l.b16 %v618
        %v633 = vpack.c.b16 %v632, %v631
        %635 = vmatpush.bf16.xpose.msra.mxu0 0
        %636 = vmatpush.bf16.xpose.msra.mxu0 0
        %637 = vmatpush.bf16.xpose.msra.mxu0 0
        %638 = vmatpush.bf16.xpose.msra.mxu0 0
        %639 = vmatpush.bf16.xpose.msra.mxu0 0
        %640 = vmatpush.bf16.xpose.msra.mxu0 0
        %641 = vmatpush.bf16.xpose.msra.mxu0 0
        %642 = vmatpush.bf16.xpose.msra.mxu0 %v633
        %643 = vmatmul.bf16.gmra.mxu0 %v633
        %v644 = vpop.f32.mrf.mxu0
        %v645 = vadd.f32 0.0, %v644
        %v646 = vpop.f32.mrf.mxu0
        %v647 = vadd.f32 0.0, %v646
        %648 = vdwg.mxu0
        %v651 = vunpack.c.l.b16 %v619
        %v652 = vunpack.c.l.b16 %v620
        %v653 = vpack.c.b16 %v652, %v651
        %655 = vmatpush.bf16.xpose.msra.mxu0 0
        %656 = vmatpush.bf16.xpose.msra.mxu0 0
        %657 = vmatpush.bf16.xpose.msra.mxu0 0
        %658 = vmatpush.bf16.xpose.msra.mxu0 0
        %659 = vmatpush.bf16.xpose.msra.mxu0 0
        %660 = vmatpush.bf16.xpose.msra.mxu0 0
        %661 = vmatpush.bf16.xpose.msra.mxu0 0
        %662 = vmatpush.bf16.xpose.msra.mxu0 %v653
        %663 = vmatmul.bf16.gmra.mxu0 %v653
        %v664 = vpop.f32.mrf.mxu0
        %v665 = vadd.f32 0.0, %v664
        %v666 = vpop.f32.mrf.mxu0
        %v667 = vadd.f32 0.0, %v666
        %668 = vdwg.mxu0
        %v671 = vunpack.c.l.b16 %v621
        %v672 = vunpack.c.l.b16 %v622
        %v673 = vpack.c.b16 %v672, %v671
        %675 = vmatpush.bf16.xpose.msra.mxu0 0
        %676 = vmatpush.bf16.xpose.msra.mxu0 0
        %677 = vmatpush.bf16.xpose.msra.mxu0 0
        %678 = vmatpush.bf16.xpose.msra.mxu0 0
        %679 = vmatpush.bf16.xpose.msra.mxu0 0
        %680 = vmatpush.bf16.xpose.msra.mxu0 0
        %681 = vmatpush.bf16.xpose.msra.mxu0 0
        %682 = vmatpush.bf16.xpose.msra.mxu0 %v673
        %683 = vmatmul.bf16.gmra.mxu0 %v673
        %v684 = vpop.f32.mrf.mxu0
        %v685 = vadd.f32 0.0, %v684
        %v686 = vpop.f32.mrf.mxu0
        %v687 = vadd.f32 0.0, %v686
        %688 = vdwg.mxu0
        %v689 = vpack.c.bf16 %v645, %v645
        %v690 = vpack.c.bf16 %v647, %v647
        %v691 = vpack.c.bf16 %v665, %v665
        %v692 = vpack.c.bf16 %v667, %v667
        %v693 = vpack.c.bf16 %v685, %v685
        %v694 = vpack.c.bf16 %v687, %v687
        %v697 = vunpack.c.l.b16 %v689
        %v698 = vunpack.c.l.b16 %v690
        %v699 = vpack.c.b16 %v698, %v697
        %v702 = vunpack.c.l.b16 %v623
        %v703 = vunpack.c.l.b16 %v624
        %v704 = vpack.c.b16 %v703, %v702
        %vm706 = vcmask 130048
        %v708 = vsel %vm706, %v699, 0
        %710 = vmatpush.bf16.msra.mxu0 0
        %711 = vmatpush.bf16.msra.mxu0 0
        %712 = vmatpush.bf16.msra.mxu0 0
        %713 = vmatpush.bf16.msra.mxu0 0
        %714 = vmatpush.bf16.msra.mxu0 0
        %715 = vmatpush.bf16.msra.mxu0 0
        %716 = vmatpush.bf16.msra.mxu0 0
        %717 = vmatpush.bf16.msra.mxu0 %v704
        %718 = vmatmul.bf16.gmra.mxu0 %v708
        %v719 = vpop.f32.mrf.mxu0
        %v720 = vadd.f32 0.0, %v719
        %v721 = vpop.f32.mrf.mxu0
        %v722 = vadd.f32 0.0, %v721
        %723 = vdwg.mxu0
        %v726 = vunpack.c.l.b16 %v691
        %v727 = vunpack.c.l.b16 %v692
        %v728 = vpack.c.b16 %v727, %v726
        %v731 = vunpack.c.l.b16 %v625
        %v732 = vunpack.c.l.b16 %v626
        %v733 = vpack.c.b16 %v732, %v731
        %v736 = vsel %vm706, %v728, 0
        %738 = vmatpush.bf16.msra.mxu0 0
        %739 = vmatpush.bf16.msra.mxu0 0
        %740 = vmatpush.bf16.msra.mxu0 0
        %741 = vmatpush.bf16.msra.mxu0 0
        %742 = vmatpush.bf16.msra.mxu0 0
        %743 = vmatpush.bf16.msra.mxu0 0
        %744 = vmatpush.bf16.msra.mxu0 0
        %745 = vmatpush.bf16.msra.mxu0 %v733
        %746 = vmatmul.bf16.gmra.mxu0 %v736
        %v747 = vpop.f32.mrf.mxu0
        %v748 = vadd.f32 0.0, %v747
        %v749 = vpop.f32.mrf.mxu0
        %v750 = vadd.f32 0.0, %v749
        %751 = vdwg.mxu0
        %v754 = vunpack.c.l.b16 %v693
        %v755 = vunpack.c.l.b16 %v694
        %v756 = vpack.c.b16 %v755, %v754
        %v759 = vunpack.c.l.b16 %v627
        %v760 = vunpack.c.l.b16 %v628
        %v761 = vpack.c.b16 %v760, %v759
        %v764 = vsel %vm706, %v756, 0
        %766 = vmatpush.bf16.msra.mxu0 0
        %767 = vmatpush.bf16.msra.mxu0 0
        %768 = vmatpush.bf16.msra.mxu0 0
        %769 = vmatpush.bf16.msra.mxu0 0
        %770 = vmatpush.bf16.msra.mxu0 0
        %771 = vmatpush.bf16.msra.mxu0 0
        %772 = vmatpush.bf16.msra.mxu0 0
        %773 = vmatpush.bf16.msra.mxu0 %v761
        %774 = vmatmul.bf16.gmra.mxu0 %v764
        %v775 = vpop.f32.mrf.mxu0
        %v776 = vadd.f32 0.0, %v775
        %v777 = vpop.f32.mrf.mxu0
        %v778 = vadd.f32 0.0, %v777
        %779 = vdwg.mxu0
        %v780 = vpack.c.bf16 %v722, %v720
        %v781 = vpack.c.bf16 %v750, %v748
        %v782 = vpack.c.bf16 %v778, %v776
        %v783 = vld [vmem:[#allocation5] sm:$0xf]
        %v784 = vld [vmem:[#allocation5 + $0x4] sm:$0xf]
        %v785 = vld [vmem:[#allocation5 + $0x8] sm:$0xf]
        %v786 = vld [vmem:[#allocation5 + $0xc] sm:$0xf]
        %v787 = vld [vmem:[#allocation5 + $0x10] sm:$0xf]
        %v788 = vld [vmem:[#allocation5 + $0x14] sm:$0xf]
        %v789 = vld [vmem:[#allocation5 + $0x18] sm:$0xf]
        %v790 = vld [vmem:[#allocation5 + $0x1c] sm:$0xf]
        %v791 = vld [vmem:[#allocation5 + $0x20] sm:$0xf]
        %v792 = vld [vmem:[#allocation5 + $0x24] sm:$0xf]
        %v793 = vld [vmem:[#allocation5 + $0x28] sm:$0xf]
        %v794 = vld [vmem:[#allocation5 + $0x2c] sm:$0xf]
        %v795 = vld [vmem:[#allocation5 + $0x30] sm:$0xf]
        %v796 = vld [vmem:[#allocation5 + $0x34] sm:$0xf]
        %v797 = vld [vmem:[#allocation5 + $0x38] sm:$0xf]
        %v798 = vld [vmem:[#allocation5 + $0x3c] sm:$0xf]
        %v799 = vld [vmem:[%s5] sm:$0x1]
        %v801 = vperm.slane %v799, 0
        %v819 = vunpack.c.l.b16 %v783
        %v820 = vunpack.c.l.b16 %v784
        %v821 = vunpack.c.l.b16 %v785
        %v822 = vunpack.c.l.b16 %v786
        %v823 = vunpack.c.l.b16 %v787
        %v824 = vunpack.c.l.b16 %v788
        %v825 = vunpack.c.l.b16 %v789
        %v826 = vunpack.c.l.b16 %v790
        %v827 = vunpack.c.l.b16 %v791
        %v828 = vunpack.c.l.b16 %v792
        %v829 = vunpack.c.l.b16 %v793
        %v830 = vunpack.c.l.b16 %v794
        %v831 = vunpack.c.l.b16 %v795
        %v832 = vunpack.c.l.b16 %v796
        %v833 = vunpack.c.l.b16 %v797
        %v834 = vunpack.c.l.b16 %v798
        %v835 = vpack.c.b16 %v820, %v819
        %v836 = vpack.c.b16 %v822, %v821
        %v837 = vpack.c.b16 %v824, %v823
        %v838 = vpack.c.b16 %v826, %v825
        %v839 = vpack.c.b16 %v828, %v827
        %v840 = vpack.c.b16 %v830, %v829
        %v841 = vpack.c.b16 %v832, %v831
        %v842 = vpack.c.b16 %v834, %v833
        %851 = vmatpush.bf16.msra.mxu0 %v842
        %852 = vmatpush.bf16.msra.mxu0 %v841
        %853 = vmatpush.bf16.msra.mxu0 %v840
        %854 = vmatpush.bf16.msra.mxu0 %v839
        %855 = vmatpush.bf16.msra.mxu0 %v838
        %856 = vmatpush.bf16.msra.mxu0 %v837
        %857 = vmatpush.bf16.msra.mxu0 %v836
        %858 = vmatpush.bf16.msra.mxu0 %v835
        %859 = vmatmul.bf16.gmra.mxu0 %v780
        %v860 = vpop.f32.mrf.mxu0
        %v861 = vadd.f32 %v801, %v860
        %v862 = vpop.f32.mrf.mxu0
        %v863 = vadd.f32 %v801, %v862
        %864 = vmatmul.bf16.gmra.mxu0 %v781
        %v865 = vpop.f32.mrf.mxu0
        %v866 = vadd.f32 %v801, %v865
        %v867 = vpop.f32.mrf.mxu0
        %v868 = vadd.f32 %v801, %v867
        %869 = vmatmul.bf16.gmra.mxu0 %v782
        %v870 = vpop.f32.mrf.mxu0
        %v871 = vadd.f32 %v801, %v870
        %v872 = vpop.f32.mrf.mxu0
        %v873 = vadd.f32 %v801, %v872
        %874 = vdwg.mxu0
        %v875 = vadd.f32 %v861, %v318
        %v876 = vadd.f32 %v863, %v319
        %v877 = vadd.f32 %v866, %v320
        %v878 = vadd.f32 %v868, %v321
        %v879 = vadd.f32 %v871, %v322
        %v880 = vadd.f32 %v873, %v323
        %881 = vst [vmem:[%s307] sm:$0xff] %v875
        %882 = vst [vmem:[%s307 + $0x8] sm:$0xff] %v876
        %883 = vst [vmem:[%s307 + $0x10] sm:$0xff] %v877
        %884 = vst [vmem:[%s307 + $0x18] sm:$0xff] %v878
        %885 = vst [vmem:[%s307 + $0x20] sm:$0xff] %v879
        %886 = vst [vmem:[%s307 + $0x28] sm:$0xff] %v880
        %s887 = sand.u32 %s168, 1
        %s888 = scalar_lea.sflag [#allocation4], %s887
        %s889 = sand.u32 %s168, 1
        %s890 = smul.addr %s889, 48
        %s891 = scalar_lea.vmem [#allocation7], %s890
        // Predicated region
        $region53: #{tpu_custom_call.1} parent=43 // pred_check
          %p892 = pneg %p178
        $region54: #{tpu_custom_call.1} parent=43 // pred_check_branch
          %894 = sbr.rel (%p892) target = $region56
        $region55: #{tpu_custom_call.1} parent=43 // pred_region
          %s895 = smul.u32 3, %s24
          %897 = vsyncadd %s888, 0
          %s898 = smul.addr %s895, 2
          %s899 = smul.addr %s898, 8
          %s900 = scalar_lea.hbm %s6, %s899
          %s901 = sshll.u32 %s891, 4
          %s902 = int_to_ptr.vmem [resolvable:$true] %s901
          %s903 = sshll.u32 %s900, 4
          %s904 = int_to_ptr.hbm [resolvable:$true] %s903
          %909 = dma.vmem_to_hbm [thread:$0]  %s902, 768, %s904, %s888, 128, 128, 8
        $region56: #{tpu_custom_call.1} parent=43 // pred_fallthru
          _
      $region44: #{tpu_custom_call.1} parent=5 // pred_fallthru
        _
      %p910 = scmp.le.s32.totalorder 2, %s19
      // Predicated region
      $region57: #{tpu_custom_call.1} parent=5 // pred_check
        %p911 = pneg %p910
      $region58: #{tpu_custom_call.1} parent=5 // pred_check_branch
        %913 = sbr.rel (%p911) target = $region60
      $region59: #{tpu_custom_call.1} parent=5 // pred_region
        %s914 = ssub.s32 %s19, 2
        // Predicated region
        $region61: #{tpu_custom_call.1} parent=59 // pred_check
          %p915 = pneg %p184
        $region62: #{tpu_custom_call.1} parent=59 // pred_check_branch
          %917 = sbr.rel (%p915) target = $region64
        $region63: #{tpu_custom_call.1} parent=59 // pred_region
          %s918 = sand.u32 %s169, 1
          %s919 = scalar_lea.sflag [#allocation4], %s918
          %s920 = sand.u32 %s169, 1
          %s921 = smul.addr %s920, 48
          %s922 = scalar_lea.vmem [#allocation7], %s921
          %924 = dma.done %s919, 768
        $region64: #{tpu_custom_call.1} parent=59 // pred_fallthru
          _
      $region60: #{tpu_custom_call.1} parent=5 // pred_fallthru
        _
    $region6: #{tpu_custom_call.1} parent=1 // loop_footer
      %s23 = sadd.s32 1, %s19
    $region7: #{tpu_custom_call.1} parent=1 // loop_footer_branch
      %18 = sbr.rel target = $region3
    $region8: #{tpu_custom_call.1} parent=1 // loop_exit
      _
    %925 = vsyncpa [#allocation3], 1
    %s926 = scalar_lea.sflag [#allocation3], 1
    %927 = vsyncpa %s926, 1
    %928 = vsyncpa [#allocation6], 1
    %929 = vsyncpa [#allocation4], 1
    %s930 = scalar_lea.sflag [#allocation4], 1
    %931 = vsyncpa %s930, 1

</llo_original>
